<compile_context>
chip_gen: v6e
topology: v6e:2x2x1
jax: 0.10.0
libtpu: 0.0.40
codegen_flags: <defaults>
</compile_context>

<pallas_src>
import jax
import jax.numpy as jnp
from jax.experimental import pallas as pl
from jax.experimental.pallas import tpu as pltpu


def _round_up(v, m):
    return ((v + m - 1) // m) * m


def _lr_kernel(x_ref, w_ref, b_ref, o_ref):
    # x_ref: (TB, F) VMEM | w_ref: (1, F) VMEM | b_ref: (1, 1) SMEM
    # o_ref: (1, 1, TB) VMEM  (lane-dense output row for this tile)
    # VPU elementwise multiply (w broadcast over sublanes) + XLU lane reduce.
    z = jnp.sum(x_ref[...] * w_ref[...], axis=-1, keepdims=True)      # (TB, 1) f32
    zt = z.T + b_ref[0, 0]                                            # (1, TB): XLU relayout, lane-dense
    o_ref[...] = jax.nn.sigmoid(zt).astype(o_ref.dtype).reshape(o_ref.shape)


def _choose_batch_tile(batch, n_features, *, dtype_bytes=4, target_tile_bytes=8 << 20):
    """Pick a batch tile from the *padded* row width, targeting ~8 MiB x tiles."""
    padded_row_bytes = _round_up(n_features, 128) * dtype_bytes       # lanes pad to 128
    tb = max(8, target_tile_bytes // padded_row_bytes)
    tb = min(tb, _round_up(batch, 8))                                 # no bigger than needed
    if tb >= 128:
        tb = (tb // 128) * 128                                        # unmasked lane-dense stores
    else:
        tb = max(8, (tb // 8) * 8)                                    # full sublanes for the x block
    return tb


def _weight_block_spec(n_features):
    """Constant (1,F) weight block: single buffer (no point double-buffering)."""
    idx = lambda i: (0, 0)
    if hasattr(pl, "Buffered"):
        try:
            return pl.BlockSpec((1, n_features), idx, pipeline_mode=pl.Buffered(1))
        except TypeError:  # older BlockSpec signature without pipeline_mode
            pass
    return pl.BlockSpec((1, n_features), idx)


def _batch_dim_semantics():
    """CORE_PARALLEL on v7x (2 TCs/chip); 'parallel' elsewhere (single-TC)."""
    try:
        kind = jax.devices()[0].device_kind.lower()
    except Exception:
        kind = ""
    if "v7" in kind and hasattr(pltpu, "CORE_PARALLEL"):
        return (pltpu.CORE_PARALLEL,)
    return ("parallel",)


def lr_forward(x, w, b, *, tile_batch=None):
    """sigmoid(x @ w.T + b) via a batch-tiled Pallas kernel.

    x: (batch, n_features) f32
    w: (1, n_features)     f32   (native torch nn.Linear(n_features, 1) weight layout)
    b: (1, 1)              f32
    returns: (batch, 1)    f32
    """
    batch, n_features = x.shape
    assert w.shape == (1, n_features)
    assert b.shape == (1, 1)

    tb = tile_batch if tile_batch is not None else _choose_batch_tile(batch, n_features)
    num_tiles = pl.cdiv(batch, tb)

    # VMEM budget with lane/sublane padding: double-buffered x & out, single w.
    padded_f_bytes = _round_up(n_features, 128) * 4
    x_tile_bytes = tb * padded_f_bytes
    w_tile_bytes = 8 * padded_f_bytes                  # (1,F) pads to 8 sublanes
    out_tile_bytes = 8 * _round_up(tb, 128) * 4        # (1,1,TB) pads to (8, TB_pad)
    vmem_limit = 2 * x_tile_bytes + 2 * w_tile_bytes + 2 * out_tile_bytes + (4 << 20)
    vmem_limit = int(min(max(vmem_limit, 16 << 20), 56 << 20))

    out3d = pl.pallas_call(
        _lr_kernel,
        out_shape=jax.ShapeDtypeStruct((num_tiles, 1, tb), jnp.float32),
        grid=(num_tiles,),
        in_specs=[
            pl.BlockSpec((tb, n_features), lambda i: (i, 0)),           # x: tiled over batch
            _weight_block_spec(n_features),                             # w: replicated, lane-dense, 1 buffer
            pl.BlockSpec(memory_space=pltpu.MemorySpace.SMEM),          # b: scalar in SMEM
        ],
        out_specs=pl.BlockSpec((1, 1, tb), lambda i: (i, 0, 0)),        # lane-dense output rows
        compiler_params=pltpu.CompilerParams(
            dimension_semantics=_batch_dim_semantics(),
            vmem_limit_bytes=vmem_limit,
        ),
    )(x, w, b)

    # (num_tiles, 1, TB) -> (num_tiles*TB, 1), drop padding rows of the last tile.
    return out3d.reshape(num_tiles * tb, 1)[:batch]


if __name__ == "__main__":
    key = jax.random.PRNGKey(0)
    kx, kw, kb, kx2, kx3 = jax.random.split(key, 5)

    # Small shapes consistent with the module: x_train -> (batch, n_features).
    batch = 8
    n_features = 32

    # Deterministic synthetic parameters (shapes from nn.Linear(n_features, 1)).
    bound = 1.0 / jnp.sqrt(jnp.float32(n_features))
    w = jax.random.uniform(kw, (1, n_features), jnp.float32, -bound, bound)
    b = jax.random.uniform(kb, (1, 1), jnp.float32, -bound, bound)

    x = jax.random.normal(kx, (batch, n_features), jnp.float32)
    out = jax.block_until_ready(lr_forward(x, w, b))
    ref = jax.nn.sigmoid(x @ w.T + b)
    assert out.shape == (batch, 1)
    assert jnp.allclose(out, ref, atol=1e-5), "mismatch vs reference (small)"

    # Multiple tiles + partial last tile with an explicit tile size.
    batch2 = 200
    x2 = jax.random.normal(kx2, (batch2, n_features), jnp.float32)
    out2 = jax.block_until_ready(lr_forward(x2, w, b, tile_batch=64))
    ref2 = jax.nn.sigmoid(x2 @ w.T + b)
    assert out2.shape == (batch2, 1)
    assert jnp.allclose(out2, ref2, atol=1e-5), "mismatch vs reference (tiled)"

    # Default (auto) tile choice with a non-multiple batch.
    batch3 = 1000
    x3 = jax.random.normal(kx3, (batch3, n_features), jnp.float32)
    out3 = jax.block_until_ready(lr_forward(x3, w, b))
    ref3 = jax.nn.sigmoid(x3 @ w.T + b)
    assert out3.shape == (batch3, 1)
    assert jnp.allclose(out3, ref3, atol=1e-5), "mismatch vs reference (auto tile)"

    print("KERNEL_OK")
</pallas_src>

<mosaic_0001>
module attributes {stable_mosaic.version = 11 : i64} {
  func.func @_lr_kernel(%arg0: i32, %arg1: memref<8x32xf32, #tpu.memory_space<vmem>>, %arg2: memref<1x32xf32, #tpu.memory_space<vmem>>, %arg3: memref<1x1xf32, #tpu.memory_space<smem>>, %arg4: memref<1x1x8xf32, #tpu.memory_space<vmem>>) attributes {dimension_semantics = [#tpu.dimension_semantics<parallel>], iteration_bounds = array<i64: 1>, scalar_prefetch = 0 : i64, scratch_operands = 0 : i64, tpu.core_type = #tpu.core_type<tc>, window_params = [{transform_indices = @transform_0, window_bounds = array<i64: 8, 32>}, {pipeline_mode = #tpu.pipeline_mode<synchronous>, transform_indices = @transform_1, window_bounds = array<i64: 1, 32>}, {transform_indices = @transform_2, window_bounds = array<i64: 1, 1>}, {transform_indices = @transform_3, window_bounds = array<i64: 1, 1, 8>}]} {
    %c0 = arith.constant 0 : index
    %c0_0 = arith.constant 0 : index
    %0 = vector.load %arg1[%c0, %c0_0] : memref<8x32xf32, #tpu.memory_space<vmem>>, vector<8x32xf32>
    %c0_1 = arith.constant 0 : index
    %c0_2 = arith.constant 0 : index
    %1 = vector.load %arg2[%c0_1, %c0_2] : memref<1x32xf32, #tpu.memory_space<vmem>>, vector<1x32xf32>
    %2 = vector.broadcast %1 : vector<1x32xf32> to vector<8x32xf32>
    %3 = arith.mulf %0, %2 : vector<8x32xf32>
    %cst = arith.constant dense<0.000000e+00> : vector<8xf32>
    %4 = vector.multi_reduction <add>, %3, %cst [1] : vector<8x32xf32> to vector<8xf32>
    %5 = vector.shape_cast %4 : vector<8xf32> to vector<8x1xf32>
    %6 = tpu.transpose %5, [1, 0] : vector<8x1xf32> -> vector<1x8xf32>
    %c0_3 = arith.constant 0 : index
    %c0_4 = arith.constant 0 : index
    %7 = memref.load %arg3[%c0_3, %c0_4] : memref<1x1xf32, #tpu.memory_space<smem>>
    %8 = vector.broadcast %7 : f32 to vector<1x8xf32>
    %9 = arith.addf %6, %8 : vector<1x8xf32>
    %10 = arith.negf %9 : vector<1x8xf32>
    %11 = math.exp %10 : vector<1x8xf32>
    %cst_5 = arith.constant 1.000000e+00 : f32
    %12 = vector.broadcast %cst_5 : f32 to vector<1x8xf32>
    %13 = arith.addf %12, %11 : vector<1x8xf32>
    %14 = arith.divf %12, %13 : vector<1x8xf32>
    %15 = vector.shape_cast %14 : vector<1x8xf32> to vector<1x1x8xf32>
    %c0_6 = arith.constant 0 : index
    %c0_7 = arith.constant 0 : index
    %c0_8 = arith.constant 0 : index
    %16 = vector.load %arg4[%c0_6, %c0_7, %c0_8] : memref<1x1x8xf32, #tpu.memory_space<vmem>>, vector<1x1x8xf32>
    tpu.vector_store %arg4[%c0_6, %c0_7, %c0_8], %15 {strides = array<i32>} : memref<1x1x8xf32, #tpu.memory_space<vmem>>, vector<1x1x8xf32>,
    return
  }
  func.func @transform_0(%arg0: i32) -> (i32, i32) {
    %c0_i32 = arith.constant 0 : i32
    %c0_i32_0 = arith.constant 0 : i32
    return %arg0, %c0_i32 : i32, i32
  }
  func.func @transform_1(%arg0: i32) -> (i32, i32) {
    %c0_i32 = arith.constant 0 : i32
    %c0_i32_0 = arith.constant 0 : i32
    %c0_i32_1 = arith.constant 0 : i32
    return %c0_i32, %c0_i32_0 : i32, i32
  }
  func.func @transform_2(%arg0: i32) -> (i32, i32) {
    %c0_i32 = arith.constant 0 : i32
    %c0_i32_0 = arith.constant 0 : i32
    %c0_i32_1 = arith.constant 0 : i32
    return %c0_i32, %c0_i32_0 : i32, i32
  }
  func.func @transform_3(%arg0: i32) -> (i32, i32, i32) {
    %c0_i32 = arith.constant 0 : i32
    %c0_i32_0 = arith.constant 0 : i32
    %c0_i32_1 = arith.constant 0 : i32
    return %arg0, %c0_i32, %c0_i32_0 : i32, i32, i32
  }
}

</mosaic_0001>

<llo_original>
// kernel: tpu_custom_call.1
$region0: #{tpu_custom_call.1}
  #allocation0 [shape = 'u32[]', space=smem, size = 0x4, offset = 0x4, fixed_abs, tag = 'smem constant byte address 0x4 - core index']
  #allocation1 [shape = 'u32[144,128]{1,0:T(1,128)}', space=vmem, size = 0x12000, scoped, tag = 'internal scratch']
  #allocation2 [shape = 'f32[1,1]{1,0:T(1,128)S(6)}', space=smem, size = 0x200, scoped, tag = 'scoped memory for tpu_custom_call.1']
  %s0 = inlined_call_operand.hbm [shape: f32[8,32], index: 0, kind: input, shape index: {}]
  %s1 = inlined_call_operand.vmem [shape: f32[1,32], index: 1, kind: input, shape index: {}]
  %s2 = inlined_call_operand.<no memory space> [shape: f32[1,1], index: 2, kind: input, shape index: {}]
  %s3 = inlined_call_operand.hbm [shape: f32[1,1,8], index: 3, kind: output, shape index: {}]
  %s4 = sld [smem:[#allocation0]]
  $region26: #{tpu_custom_call.1} parent=0
    _
  %s6 = ssub.s32 1, %s4
  %s7 = scalar_select 0, %s6, %s4
  %8 = sst [smem:[#allocation2]] %s2
  $region1: #{tpu_custom_call.1} parent=0
    #allocation3 [shape = 'u8[4096]{0}', space=vmem, size = 0x1000, scoped, tag = 'input window, operand 0, single buffered']
    #allocation4 [shape = 's32[1]{0}', space=sflag, size = 0x4, scoped, tag = 'scoped memory for tpu_custom_call.1']
    #allocation5 [shape = 's32[1]{0}', space=sflag, size = 0x4, scoped, tag = 'scoped memory for tpu_custom_call.1']
    #allocation6 [shape = 'u8[512]{0}', space=vmem, size = 0x400, scoped, tag = 'output window, operand 0, single buffered']
    %9 = vsyncpa [#allocation4], 0
    %10 = vsyncpa [#allocation5], 0
    // Predicated region
    $region2: #{tpu_custom_call.1} parent=1 // pred_check
      _
    $region3: #{tpu_custom_call.1} parent=1 // pred_check_branch
      %12 = sbr.rel (0) target = $region5
    $region4: #{tpu_custom_call.1} parent=1 // pred_region
      %s14 = ssub.s32 128, 128
      %15 = vsyncadd [#allocation4], %s14
      %s17 = sshll.u32 [#allocation3], 4
      %s18 = int_to_ptr.vmem [resolvable:$true] %s17
      %20 = dma.hbm_to_vmem [thread:$0]  %s0, 128, %s18, [#allocation4]
    $region5: #{tpu_custom_call.1} parent=1 // pred_fallthru
      _
    // Predicated region
    $region6: #{tpu_custom_call.1} parent=1 // pred_check
      _
    $region7: #{tpu_custom_call.1} parent=1 // pred_check_branch
      %22 = sbr.rel (0) target = $region9
    $region8: #{tpu_custom_call.1} parent=1 // pred_region
      _
    $region9: #{tpu_custom_call.1} parent=1 // pred_fallthru
      _
    // Predicated region
    $region10: #{tpu_custom_call.1} parent=1 // pred_check
      _
    $region11: #{tpu_custom_call.1} parent=1 // pred_check_branch
      %24 = sbr.rel (0) target = $region13
    $region12: #{tpu_custom_call.1} parent=1 // pred_region
      _
    $region13: #{tpu_custom_call.1} parent=1 // pred_fallthru
      _
    // Predicated region
    $region14: #{tpu_custom_call.1} parent=1 // pred_check
      _
    $region15: #{tpu_custom_call.1} parent=1 // pred_check_branch
      %26 = sbr.rel (0) target = $region17
    $region16: #{tpu_custom_call.1} parent=1 // pred_region
      %27 = dma.done [#allocation4], 128
    $region17: #{tpu_custom_call.1} parent=1 // pred_fallthru
      _
    %v28 = vld [vmem:[#allocation3] sm:$0xff]
    %v29 = vld [vmem:[%s1] sm:$0x1]
    %v31 = vlaneseq
    %v32 = vshrl.u32 %v31, 7
    %v33 = vsub.s32 0, %v32
    %v34 = vrot.slane %v29, %v33
    %v36 = vmul.f32 %v28, %v34
    %vm37 = vcmask 261120
    %v38 = vsel %vm37, %v36, 0.0
    %39 = vadd.xlane.f32.xlu0 %v38
    %v40 = vpop.xlane.xlu0 %39
    %41 = vxpose.xlu0.b32.start [1/16] %v40, 128
    %42 = vxpose.xlu0.b32.cont [2/16] 0.0, 128
    %43 = vxpose.xlu0.b32.cont [3/16] 0.0, 128
    %44 = vxpose.xlu0.b32.cont [4/16] 0.0, 128
    %45 = vxpose.xlu0.b32.cont [5/16] 0.0, 128
    %46 = vxpose.xlu0.b32.cont [6/16] 0.0, 128
    %47 = vxpose.xlu0.b32.cont [7/16] 0.0, 128
    %48 = vxpose.xlu0.b32.cont [8/16] 0.0, 128
    %49 = vxpose.xlu0.b32.cont [9/16] 0.0, 128
    %50 = vxpose.xlu0.b32.cont [10/16] 0.0, 128
    %51 = vxpose.xlu0.b32.cont [11/16] 0.0, 128
    %52 = vxpose.xlu0.b32.cont [12/16] 0.0, 128
    %53 = vxpose.xlu0.b32.cont [13/16] 0.0, 128
    %54 = vxpose.xlu0.b32.cont [14/16] 0.0, 128
    %55 = vxpose.xlu0.b32.cont [15/16] 0.0, 128
    %56 = vxpose.xlu0.b32.end [16/16] 0.0, 128
    %v57 = vpop.trf.xlu0
    %v58 = vpop.trf.xlu0
    %v59 = vpop.trf.xlu0
    %v60 = vpop.trf.xlu0
    %v61 = vpop.trf.xlu0
    %v62 = vpop.trf.xlu0
    %v63 = vpop.trf.xlu0
    %v64 = vpop.trf.xlu0
    %v65 = vpop.trf.xlu0
    %v66 = vpop.trf.xlu0
    %v67 = vpop.trf.xlu0
    %v68 = vpop.trf.xlu0
    %v69 = vpop.trf.xlu0
    %v70 = vpop.trf.xlu0
    %v71 = vpop.trf.xlu0
    %v72 = vpop.trf.xlu0
    %s73 = sld [smem:[#allocation2]]
    %v74 = vstv %s73
    %v75 = vadd.f32 %v57, %v74
    %v76 = vxor.u32 %v75, 2147483648
    %v77 = vmul.f32 %v76, 1.442695
    %v78 = vpow.pop %v77
    %v79 = vadd.f32 %v78, 1.0
    %v80 = vrcp.pop %v79
    %v81 = vmul.f32 1.0, %v80
    %vm82 = vcmask 57344
    %83 = vst.msk [vmem:[#allocation6] sm:$0x1] %vm82, %v81
    // Predicated region
    $region18: #{tpu_custom_call.1} parent=1 // pred_check
      _
    $region19: #{tpu_custom_call.1} parent=1 // pred_check_branch
      %85 = sbr.rel (0) target = $region21
    $region20: #{tpu_custom_call.1} parent=1 // pred_region
      %s87 = ssub.s32 16, 16
      %88 = vsyncadd [#allocation5], %s87
      %s90 = sshll.u32 [#allocation6], 4
      %s91 = int_to_ptr.vmem [resolvable:$true] %s90
      %93 = dma.vmem_to_hbm [thread:$0]  %s91, 16, %s3, [#allocation5]
    $region21: #{tpu_custom_call.1} parent=1 // pred_fallthru
      _
    // Predicated region
    $region22: #{tpu_custom_call.1} parent=1 // pred_check
      _
    $region23: #{tpu_custom_call.1} parent=1 // pred_check_branch
      %95 = sbr.rel (0) target = $region25
    $region24: #{tpu_custom_call.1} parent=1 // pred_region
      %96 = dma.done [#allocation5], 16
    $region25: #{tpu_custom_call.1} parent=1 // pred_fallthru
      _
    %97 = vsyncpa [#allocation4], 1
    %98 = vsyncpa [#allocation5], 1

</llo_original>
